<compile_context>
chip_gen: v6e
topology: v6e:2x2x1
jax: 0.10.0
libtpu: 0.0.40
codegen_flags: <defaults>
</compile_context>

<pallas_src>
import functools

import jax
import jax.numpy as jnp
from jax import lax
from jax.experimental import pallas as pl
from jax.experimental.pallas import tpu as pltpu


# ---------------------------------------------------------------------------
# Kernel
# ---------------------------------------------------------------------------
def _lif_kernel(x_ref, o_ref, *, T, thresh, tau, row_chunk, n_chunks, unroll_t):
    """x_ref / o_ref: (T, r_blk, 128) VMEM tiles.

    The row dim is processed in chunks of `row_chunk` rows; per chunk, `mem`
    is a (row_chunk, 128) f32 register carry over the unrolled time loop.
    """

    def run_chunk(r0):
        mem0 = jnp.zeros((row_chunk, 128), dtype=jnp.float32)

        def time_step(t, mem):
            xt = x_ref[t, pl.ds(r0, row_chunk), :].astype(jnp.float32)
            if tau != 1.0:
                mem = mem * tau
            mem = mem + xt
            spike = mem > thresh
            o_ref[t, pl.ds(r0, row_chunk), :] = spike.astype(o_ref.dtype)
            return jnp.where(spike, 0.0, mem)

        lax.fori_loop(0, T, time_step, mem0, unroll=unroll_t)

    if n_chunks == 1:
        run_chunk(0)
    else:

        @pl.loop(0, n_chunks)
        def _(c):
            run_chunk(pl.multiple_of(c * row_chunk, 8))


# ---------------------------------------------------------------------------
# Host-side sizing helpers
# ---------------------------------------------------------------------------
def _round_up(v, m):
    return -(-v // m) * m


def _vmem_capacity_bytes():
    """Physical per-core VMEM; conservative 64 MiB (v7x) if unknown."""
    default = 64 << 20
    try:
        info = pltpu.get_tpu_info()
    except Exception:
        return default
    for name in ("vmem_capacity_bytes", "vmem_size_bytes", "vmem_bytes"):
        v = getattr(info, name, None)
        if v:
            return int(v)
    return default


def _choose_block_rows(R, T, elem_bytes, sub, target_tile_bytes):
    """Rows-of-128 per grid block: input tile ~= target, multiple of `sub`,
    and (when >1 step) an even step count for v7x's two TensorCores."""
    per_row_bytes = T * 128 * elem_bytes
    r = (target_tile_bytes // per_row_bytes) // sub * sub
    r = max(sub, r)
    if r >= R:
        return R
    steps = -(-R // r)
    if steps % 2 == 1:
        r_alt = _round_up(-(-R // (steps + 1)), sub)
        if r_alt >= sub and (-(-R // r_alt)) % 2 == 0:
            r = r_alt
    return min(r, R)


def _choose_row_chunk(r_blk, sub):
    """In-kernel row chunk: <=128 rows (mem <= 16 f32 vregs), multiple of
    `sub`, dividing r_blk exactly."""
    cap = 128
    if r_blk <= cap:
        return r_blk
    best = sub
    c = sub
    while c <= cap:
        if r_blk % c == 0:
            best = c
        c += sub
    return best


# ---------------------------------------------------------------------------
# Public wrapper
# ---------------------------------------------------------------------------
def lif_spike_in(x, *, thresh=1.0, tau=1.0, target_tile_bytes=None):
    """x: [T, B, C, H, W] (or [T, ...]) float array -> spikes, same shape/dtype.

    Membrane potential is accumulated in f32 (intentional; more robust than
    the input dtype for bf16/fp16 inputs).
    """
    T = x.shape[0]
    orig_shape = x.shape
    M = 1
    for d in x.shape[1:]:
        M *= d

    elem_bytes = jnp.dtype(x.dtype).itemsize
    sub = 8 * max(1, 4 // elem_bytes)          # 8 (f32) / 16 (bf16) / 32 (int8)

    # Lane/sublane-dense layout: (T, R, 128) with R a multiple of `sub`.
    # Conv feature maps normally have M divisible by 128*sub -> no pad.
    pad = (-M) % (128 * sub)
    x2 = x.reshape(T, M)
    if pad:
        x2 = jnp.pad(x2, ((0, 0), (0, pad)))
    Mp = M + pad
    R = Mp // 128
    x3 = x2.reshape(T, R, 128)

    vmem_cap = _vmem_capacity_bytes()
    if target_tile_bytes is None:
        # ~8 MiB tiles on 64 MiB parts (v7x), ~12 MiB on 128 MiB parts (v5e/v6e)
        target_tile_bytes = (12 << 20) if vmem_cap >= (96 << 20) else (8 << 20)

    r_blk = _choose_block_rows(R, T, elem_bytes, sub, int(target_tile_bytes))
    row_chunk = _choose_row_chunk(r_blk, sub)
    n_chunks = r_blk // row_chunk
    grid = (pl.cdiv(R, r_blk),)

    tile_bytes = T * r_blk * 128 * elem_bytes
    # Double-buffered in + out; chunked f32 scratch is only a few vregs, so a
    # fixed headroom suffices even for bf16 inputs.
    limit_cap = max(32 << 20, min(vmem_cap - (16 << 20), 100 << 20))
    vmem_limit = int(min(limit_cap, max(32 << 20, 4 * tile_bytes + (8 << 20))))

    kernel = functools.partial(
        _lif_kernel,
        T=T,
        thresh=float(thresh),
        tau=float(tau),
        row_chunk=row_chunk,
        n_chunks=n_chunks,
        unroll_t=(T <= 16),
    )

    out = pl.pallas_call(
        kernel,
        out_shape=jax.ShapeDtypeStruct((T, R, 128), x.dtype),
        grid_spec=pltpu.PrefetchScalarGridSpec(
            num_scalar_prefetch=0,
            grid=grid,
            in_specs=[pl.BlockSpec((T, r_blk, 128), lambda i: (0, i, 0))],
            out_specs=pl.BlockSpec((T, r_blk, 128), lambda i: (0, i, 0)),
        ),
        compiler_params=pltpu.CompilerParams(
            dimension_semantics=("parallel",),
            vmem_limit_bytes=vmem_limit,
        ),
    )(x3)

    out = out.reshape(T, Mp)
    if pad:
        out = out[:, :M]
    return out.reshape(orig_shape)


# ---------------------------------------------------------------------------
# Pure-JAX reference (mirrors the PyTorch loop; f32 accumulation like kernel)
# ---------------------------------------------------------------------------
def lif_spike_in_ref(x, *, thresh=1.0, tau=1.0):
    T = x.shape[0]
    mem = jnp.zeros(x.shape[1:], dtype=jnp.float32)
    outs = []
    for t in range(T):
        if tau != 1.0:
            mem = mem * jnp.float32(tau)
        mem = mem + x[t].astype(jnp.float32)
        spike = mem > thresh
        outs.append(spike.astype(x.dtype))
        mem = jnp.where(spike, jnp.float32(0.0), mem)
    return jnp.stack(outs, axis=0)


if __name__ == "__main__":
    # LIFSpikeIN(T=4, thresh=1.0, tau=1.0, gama=0.5); gama is backward-only.
    key = jax.random.PRNGKey(0)

    # 1) Base case: f32, tau=1.0 -> bit-exact vs reference.
    T, B, C, H, W = 4, 2, 4, 16, 16
    x = jax.random.normal(key, (T, B, C, H, W), dtype=jnp.float32)
    out = jax.block_until_ready(lif_spike_in(x, thresh=1.0, tau=1.0))
    ref = lif_spike_in_ref(x, thresh=1.0, tau=1.0)
    assert out.shape == x.shape and out.dtype == x.dtype
    assert jnp.array_equal(out, ref), "f32 tau=1.0 mismatch vs reference"

    # 2) tau != 1.0 (allow a vanishing number of near-threshold flips from
    #    possible FMA contraction differences in the XLA reference).
    out2 = jax.block_until_ready(lif_spike_in(x, thresh=1.0, tau=0.75))
    ref2 = lif_spike_in_ref(x, thresh=1.0, tau=0.75)
    assert float(jnp.mean(jnp.abs(out2 - ref2))) < 1e-3, "tau=0.75 mismatch"

    # 3) Larger f32 case exercising the in-kernel row-chunk loop (r_blk=256).
    x3 = jax.random.normal(jax.random.PRNGKey(1), (4, 4, 8, 32, 32), jnp.float32)
    out3 = jax.block_until_ready(lif_spike_in(x3, thresh=1.0, tau=1.0))
    ref3 = lif_spike_in_ref(x3, thresh=1.0, tau=1.0)
    assert jnp.array_equal(out3, ref3), "chunked-row case mismatch"

    # 4) bf16 input with a forced small tile -> multi-step parallel grid path.
    xb = jax.random.normal(jax.random.PRNGKey(2), (4, 2, 8, 32, 32), jnp.bfloat16)
    out4 = jax.block_until_ready(
        lif_spike_in(xb, thresh=1.0, tau=1.0, target_tile_bytes=1 << 16)
    )
    ref4 = lif_spike_in_ref(xb, thresh=1.0, tau=1.0)
    diff4 = jnp.mean(
        jnp.abs(out4.astype(jnp.float32) - ref4.astype(jnp.float32))
    )
    assert float(diff4) < 1e-3, "bf16 multi-grid-step case mismatch"

    print("KERNEL_OK")
</pallas_src>

<mosaic_0001>
module attributes {stable_mosaic.version = 11 : i64} {
  func.func @_lif_kernel(%arg0: i32, %arg1: memref<4x16x128xf32, #tpu.memory_space<vmem>>, %arg2: memref<4x16x128xf32, #tpu.memory_space<vmem>>) attributes {dimension_semantics = [#tpu.dimension_semantics<parallel>], iteration_bounds = array<i64: 1>, scalar_prefetch = 0 : i64, scratch_operands = 0 : i64, tpu.core_type = #tpu.core_type<tc>, window_params = [{transform_indices = @transform_0, window_bounds = array<i64: 4, 16, 128>}, {transform_indices = @transform_1, window_bounds = array<i64: 4, 16, 128>}]} {
    %cst = arith.constant 0.000000e+00 : f32
    %0 = vector.broadcast %cst : f32 to vector<16x128xf32>
    %c0_i32 = arith.constant 0 : i32
    %1 = arith.index_cast %c0_i32 : i32 to index
    %c0 = arith.constant 0 : index
    %c0_0 = arith.constant 0 : index
    %2 = vector.load %arg1[%1, %c0, %c0_0] : memref<4x16x128xf32, #tpu.memory_space<vmem>>, vector<1x16x128xf32>
    %3 = vector.shape_cast %2 : vector<1x16x128xf32> to vector<16x128xf32>
    %4 = arith.addf %0, %3 : vector<16x128xf32>
    %cst_1 = arith.constant 1.000000e+00 : f32
    %5 = vector.broadcast %cst_1 : f32 to vector<16x128xf32>
    %6 = arith.cmpf ogt, %4, %5 : vector<16x128xf32>
    %7 = arith.extui %6 : vector<16x128xi1> to vector<16x128xi32>
    %8 = arith.sitofp %7 : vector<16x128xi32> to vector<16x128xf32>
    %9 = arith.index_cast %c0_i32 : i32 to index
    %c0_2 = arith.constant 0 : index
    %c0_3 = arith.constant 0 : index
    %10 = vector.load %arg2[%9, %c0_2, %c0_3] : memref<4x16x128xf32, #tpu.memory_space<vmem>>, vector<1x16x128xf32>
    %11 = vector.shape_cast %10 : vector<1x16x128xf32> to vector<16x128xf32>
    %12 = vector.shape_cast %8 : vector<16x128xf32> to vector<1x16x128xf32>
    tpu.vector_store %arg2[%9, %c0_2, %c0_3], %12 {strides = array<i32>} : memref<4x16x128xf32, #tpu.memory_space<vmem>>, vector<1x16x128xf32>,
    %cst_4 = arith.constant 0.000000e+00 : f32
    %13 = vector.broadcast %cst_4 : f32 to vector<16x128xf32>
    %14 = arith.select %6, %13, %4 : vector<16x128xi1>, vector<16x128xf32>
    %c1_i32 = arith.constant 1 : i32
    %15 = arith.index_cast %c1_i32 : i32 to index
    %c0_5 = arith.constant 0 : index
    %c0_6 = arith.constant 0 : index
    %16 = vector.load %arg1[%15, %c0_5, %c0_6] : memref<4x16x128xf32, #tpu.memory_space<vmem>>, vector<1x16x128xf32>
    %17 = vector.shape_cast %16 : vector<1x16x128xf32> to vector<16x128xf32>
    %18 = arith.addf %14, %17 : vector<16x128xf32>
    %cst_7 = arith.constant 1.000000e+00 : f32
    %19 = vector.broadcast %cst_7 : f32 to vector<16x128xf32>
    %20 = arith.cmpf ogt, %18, %19 : vector<16x128xf32>
    %21 = arith.extui %20 : vector<16x128xi1> to vector<16x128xi32>
    %22 = arith.sitofp %21 : vector<16x128xi32> to vector<16x128xf32>
    %23 = arith.index_cast %c1_i32 : i32 to index
    %c0_8 = arith.constant 0 : index
    %c0_9 = arith.constant 0 : index
    %24 = vector.load %arg2[%23, %c0_8, %c0_9] : memref<4x16x128xf32, #tpu.memory_space<vmem>>, vector<1x16x128xf32>
    %25 = vector.shape_cast %24 : vector<1x16x128xf32> to vector<16x128xf32>
    %26 = vector.shape_cast %22 : vector<16x128xf32> to vector<1x16x128xf32>
    tpu.vector_store %arg2[%23, %c0_8, %c0_9], %26 {strides = array<i32>} : memref<4x16x128xf32, #tpu.memory_space<vmem>>, vector<1x16x128xf32>,
    %cst_10 = arith.constant 0.000000e+00 : f32
    %27 = vector.broadcast %cst_10 : f32 to vector<16x128xf32>
    %28 = arith.select %20, %27, %18 : vector<16x128xi1>, vector<16x128xf32>
    %c2_i32 = arith.constant 2 : i32
    %29 = arith.index_cast %c2_i32 : i32 to index
    %c0_11 = arith.constant 0 : index
    %c0_12 = arith.constant 0 : index
    %30 = vector.load %arg1[%29, %c0_11, %c0_12] : memref<4x16x128xf32, #tpu.memory_space<vmem>>, vector<1x16x128xf32>
    %31 = vector.shape_cast %30 : vector<1x16x128xf32> to vector<16x128xf32>
    %32 = arith.addf %28, %31 : vector<16x128xf32>
    %cst_13 = arith.constant 1.000000e+00 : f32
    %33 = vector.broadcast %cst_13 : f32 to vector<16x128xf32>
    %34 = arith.cmpf ogt, %32, %33 : vector<16x128xf32>
    %35 = arith.extui %34 : vector<16x128xi1> to vector<16x128xi32>
    %36 = arith.sitofp %35 : vector<16x128xi32> to vector<16x128xf32>
    %37 = arith.index_cast %c2_i32 : i32 to index
    %c0_14 = arith.constant 0 : index
    %c0_15 = arith.constant 0 : index
    %38 = vector.load %arg2[%37, %c0_14, %c0_15] : memref<4x16x128xf32, #tpu.memory_space<vmem>>, vector<1x16x128xf32>
    %39 = vector.shape_cast %38 : vector<1x16x128xf32> to vector<16x128xf32>
    %40 = vector.shape_cast %36 : vector<16x128xf32> to vector<1x16x128xf32>
    tpu.vector_store %arg2[%37, %c0_14, %c0_15], %40 {strides = array<i32>} : memref<4x16x128xf32, #tpu.memory_space<vmem>>, vector<1x16x128xf32>,
    %cst_16 = arith.constant 0.000000e+00 : f32
    %41 = vector.broadcast %cst_16 : f32 to vector<16x128xf32>
    %42 = arith.select %34, %41, %32 : vector<16x128xi1>, vector<16x128xf32>
    %c3_i32 = arith.constant 3 : i32
    %43 = arith.index_cast %c3_i32 : i32 to index
    %c0_17 = arith.constant 0 : index
    %c0_18 = arith.constant 0 : index
    %44 = vector.load %arg1[%43, %c0_17, %c0_18] : memref<4x16x128xf32, #tpu.memory_space<vmem>>, vector<1x16x128xf32>
    %45 = vector.shape_cast %44 : vector<1x16x128xf32> to vector<16x128xf32>
    %46 = arith.addf %42, %45 : vector<16x128xf32>
    %cst_19 = arith.constant 1.000000e+00 : f32
    %47 = vector.broadcast %cst_19 : f32 to vector<16x128xf32>
    %48 = arith.cmpf ogt, %46, %47 : vector<16x128xf32>
    %49 = arith.extui %48 : vector<16x128xi1> to vector<16x128xi32>
    %50 = arith.sitofp %49 : vector<16x128xi32> to vector<16x128xf32>
    %51 = arith.index_cast %c3_i32 : i32 to index
    %c0_20 = arith.constant 0 : index
    %c0_21 = arith.constant 0 : index
    %52 = vector.load %arg2[%51, %c0_20, %c0_21] : memref<4x16x128xf32, #tpu.memory_space<vmem>>, vector<1x16x128xf32>
    %53 = vector.shape_cast %52 : vector<1x16x128xf32> to vector<16x128xf32>
    %54 = vector.shape_cast %50 : vector<16x128xf32> to vector<1x16x128xf32>
    tpu.vector_store %arg2[%51, %c0_20, %c0_21], %54 {strides = array<i32>} : memref<4x16x128xf32, #tpu.memory_space<vmem>>, vector<1x16x128xf32>,
    %cst_22 = arith.constant 0.000000e+00 : f32
    %55 = vector.broadcast %cst_22 : f32 to vector<16x128xf32>
    %56 = arith.select %48, %55, %46 : vector<16x128xi1>, vector<16x128xf32>
    %c4_i32 = arith.constant 4 : i32
    return
  }
  func.func @transform_0(%arg0: i32) -> (i32, i32, i32) {
    %c0_i32 = arith.constant 0 : i32
    %c0_i32_0 = arith.constant 0 : i32
    %c0_i32_1 = arith.constant 0 : i32
    return %c0_i32, %arg0, %c0_i32_0 : i32, i32, i32
  }
  func.func @transform_1(%arg0: i32) -> (i32, i32, i32) {
    %c0_i32 = arith.constant 0 : i32
    %c0_i32_0 = arith.constant 0 : i32
    %c0_i32_1 = arith.constant 0 : i32
    return %c0_i32, %arg0, %c0_i32_0 : i32, i32, i32
  }
}

</mosaic_0001>

<llo_original>
// kernel: tpu_custom_call.1
$region0: #{tpu_custom_call.1}
  #allocation0 [shape = 'u32[]', space=smem, size = 0x4, offset = 0x4, fixed_abs, tag = 'smem constant byte address 0x4 - core index']
  #allocation1 [shape = 'u32[144,128]{1,0:T(1,128)}', space=vmem, size = 0x12000, scoped, tag = 'internal scratch']
  %s0 = inlined_call_operand.hbm [shape: f32[4,16,128], index: 0, kind: input, shape index: {}]
  %s1 = inlined_call_operand.hbm [shape: f32[4,16,128], index: 1, kind: output, shape index: {}]
  %s2 = sld [smem:[#allocation0]]
  $region18: #{tpu_custom_call.1} parent=0
    _
  %s4 = ssub.s32 1, %s2
  %s5 = scalar_select 0, %s4, %s2
  $region1: #{tpu_custom_call.1} parent=0
    #allocation2 [shape = 'u8[32768]{0}', space=vmem, size = 0x8000, scoped, tag = 'input window, operand 0, single buffered']
    #allocation3 [shape = 's32[1]{0}', space=sflag, size = 0x4, scoped, tag = 'scoped memory for tpu_custom_call.1']
    #allocation4 [shape = 's32[1]{0}', space=sflag, size = 0x4, scoped, tag = 'scoped memory for tpu_custom_call.1']
    #allocation5 [shape = 'u8[32768]{0}', space=vmem, size = 0x8000, scoped, tag = 'output window, operand 0, single buffered']
    %6 = vsyncpa [#allocation3], 0
    %7 = vsyncpa [#allocation4], 0
    // Predicated region
    $region2: #{tpu_custom_call.1} parent=1 // pred_check
      _
    $region3: #{tpu_custom_call.1} parent=1 // pred_check_branch
      %9 = sbr.rel (0) target = $region5
    $region4: #{tpu_custom_call.1} parent=1 // pred_region
      %s11 = ssub.s32 1024, 1024
      %12 = vsyncadd [#allocation3], %s11
      %s13 = sshll.u32 [#allocation2], 4
      %s14 = int_to_ptr.vmem [resolvable:$true] %s13
      %19 = dma.hbm_to_vmem [thread:$0]  %s0, 1024, %s14, [#allocation3], 128, 128, 8
    $region5: #{tpu_custom_call.1} parent=1 // pred_fallthru
      _
    // Predicated region
    $region6: #{tpu_custom_call.1} parent=1 // pred_check
      _
    $region7: #{tpu_custom_call.1} parent=1 // pred_check_branch
      %21 = sbr.rel (0) target = $region9
    $region8: #{tpu_custom_call.1} parent=1 // pred_region
      %22 = dma.done [#allocation3], 1024
    $region9: #{tpu_custom_call.1} parent=1 // pred_fallthru
      _
    %v23 = vld [vmem:[#allocation2] sm:$0xff]
    %v24 = vld [vmem:[#allocation2 + $0x8] sm:$0xff]
    %v25 = vadd.f32 %v23, 0.0
    %v26 = vadd.f32 %v24, 0.0
    %vm27 = vcmp.gt.f32.partialorder %v25, 1.0
    %vm28 = vcmp.gt.f32.partialorder %v26, 1.0
    %v29 = vsel %vm27, 1, 0
    %v30 = vsel %vm28, 1, 0
    %v31 = vcvt.s32.f32 %v29
    %v32 = vcvt.s32.f32 %v30
    %33 = vst [vmem:[#allocation5] sm:$0xff] %v31
    %34 = vst [vmem:[#allocation5 + $0x8] sm:$0xff] %v32
    %v35 = vsel %vm27, 0.0, %v25
    %v36 = vsel %vm28, 0.0, %v26
    %s37 = scalar_lea.vmem [#allocation2], 16
    %v38 = vld [vmem:[%s37] sm:$0xff]
    %v39 = vld [vmem:[%s37 + $0x8] sm:$0xff]
    %v40 = vadd.f32 %v35, %v38
    %v41 = vadd.f32 %v36, %v39
    %vm42 = vcmp.gt.f32.partialorder %v40, 1.0
    %vm43 = vcmp.gt.f32.partialorder %v41, 1.0
    %v44 = vsel %vm42, 1, 0
    %v45 = vsel %vm43, 1, 0
    %v46 = vcvt.s32.f32 %v44
    %v47 = vcvt.s32.f32 %v45
    %s48 = scalar_lea.vmem [#allocation5], 16
    %49 = vst [vmem:[%s48] sm:$0xff] %v46
    %50 = vst [vmem:[%s48 + $0x8] sm:$0xff] %v47
    %v51 = vsel %vm42, 0.0, %v40
    %v52 = vsel %vm43, 0.0, %v41
    %s53 = scalar_lea.vmem [#allocation2], 32
    %v54 = vld [vmem:[%s53] sm:$0xff]
    %v55 = vld [vmem:[%s53 + $0x8] sm:$0xff]
    %v56 = vadd.f32 %v51, %v54
    %v57 = vadd.f32 %v52, %v55
    %vm58 = vcmp.gt.f32.partialorder %v56, 1.0
    %vm59 = vcmp.gt.f32.partialorder %v57, 1.0
    %v60 = vsel %vm58, 1, 0
    %v61 = vsel %vm59, 1, 0
    %v62 = vcvt.s32.f32 %v60
    %v63 = vcvt.s32.f32 %v61
    %s64 = scalar_lea.vmem [#allocation5], 32
    %65 = vst [vmem:[%s64] sm:$0xff] %v62
    %66 = vst [vmem:[%s64 + $0x8] sm:$0xff] %v63
    %v67 = vsel %vm58, 0.0, %v56
    %v68 = vsel %vm59, 0.0, %v57
    %s69 = scalar_lea.vmem [#allocation2], 48
    %v70 = vld [vmem:[%s69] sm:$0xff]
    %v71 = vld [vmem:[%s69 + $0x8] sm:$0xff]
    %v72 = vadd.f32 %v67, %v70
    %v73 = vadd.f32 %v68, %v71
    %vm74 = vcmp.gt.f32.partialorder %v72, 1.0
    %vm75 = vcmp.gt.f32.partialorder %v73, 1.0
    %v76 = vsel %vm74, 1, 0
    %v77 = vsel %vm75, 1, 0
    %v78 = vcvt.s32.f32 %v76
    %v79 = vcvt.s32.f32 %v77
    %s80 = scalar_lea.vmem [#allocation5], 48
    %81 = vst [vmem:[%s80] sm:$0xff] %v78
    %82 = vst [vmem:[%s80 + $0x8] sm:$0xff] %v79
    // Predicated region
    $region10: #{tpu_custom_call.1} parent=1 // pred_check
      _
    $region11: #{tpu_custom_call.1} parent=1 // pred_check_branch
      %84 = sbr.rel (0) target = $region13
    $region12: #{tpu_custom_call.1} parent=1 // pred_region
      %s86 = ssub.s32 1024, 1024
      %87 = vsyncadd [#allocation4], %s86
      %s88 = sshll.u32 [#allocation5], 4
      %s89 = int_to_ptr.vmem [resolvable:$true] %s88
      %94 = dma.vmem_to_hbm [thread:$0]  %s89, 1024, %s1, [#allocation4], 128, 128, 8
    $region13: #{tpu_custom_call.1} parent=1 // pred_fallthru
      _
    // Predicated region
    $region14: #{tpu_custom_call.1} parent=1 // pred_check
      _
    $region15: #{tpu_custom_call.1} parent=1 // pred_check_branch
      %96 = sbr.rel (0) target = $region17
    $region16: #{tpu_custom_call.1} parent=1 // pred_region
      %97 = dma.done [#allocation4], 1024
    $region17: #{tpu_custom_call.1} parent=1 // pred_fallthru
      _
    %98 = vsyncpa [#allocation3], 1
    %99 = vsyncpa [#allocation4], 1

</llo_original>
